<compile_context>
chip_gen: v5e
topology: v5e:2x2
jax: 0.10.0
libtpu: 0.0.40
codegen_flags: <defaults>
</compile_context>

<pallas_src>
import jax
import jax.numpy as jnp
from jax import lax
from jax.experimental import pallas as pl
from jax.experimental.pallas import tpu as pltpu


def dqn_kernel(x_ref, w1_ref, b1_ref, w2_ref, b2_ref, w3_ref, b3_ref, o_ref):
    x = x_ref[...]                                                # (TB, 12) batch-major
    # fc1 + ReLU: (32,12) x (TB,12)^T -> (32, TB).  NT contraction: the
    # batch->lane swap happens on the MXU operand path, not a separate pass.
    h1 = lax.dot_general(w1_ref[...], x,
                         dimension_numbers=(((1,), (1,)), ((), ())),
                         preferred_element_type=jnp.float32)
    h1 = jnp.maximum(h1 + b1_ref[...], 0.0)                       # (32, TB)
    # fc2 + ReLU
    h2 = jnp.dot(w2_ref[...], h1, preferred_element_type=jnp.float32)
    h2 = jnp.maximum(h2 + b2_ref[...], 0.0)                       # (32, TB)
    # fc4 (no activation)
    out = jnp.dot(w3_ref[...], h2, preferred_element_type=jnp.float32)
    o_ref[...] = (out + b3_ref[...]).astype(o_ref.dtype)          # (1, TB) lane-dense


def _round_up(v, m):
    return ((v + m - 1) // m) * m


def dqn_forward(x, params, *, tb=8192):
    """x: (B, 12) float32 (PyTorch batch-major) -> (B, 1) float32."""
    w1, b1, w2, b2, w3, b3 = params
    B, feat = x.shape
    assert feat == 12, feat

    # Batch tile: multiple of 128 lanes, capped at `tb` and at the batch size.
    TB = min(_round_up(tb, 128), _round_up(B, 128))
    if B > 128:
        # Keep >= 2 grid steps so both v7x TensorCores get work (no-op v5e/v6e).
        TB = min(TB, _round_up(pl.cdiv(B, 2), 128))
    n_blocks = pl.cdiv(B, TB)

    const = lambda a: pl.BlockSpec(a.shape, lambda i: (0, 0))

    out_t = pl.pallas_call(
        dqn_kernel,
        out_shape=jax.ShapeDtypeStruct((1, B), jnp.float32),
        grid_spec=pltpu.PrefetchScalarGridSpec(
            num_scalar_prefetch=0,
            grid=(n_blocks,),
            in_specs=[
                pl.BlockSpec((TB, 12), lambda i: (i, 0)),         # contiguous x slab
                const(w1), const(b1),
                const(w2), const(b2),
                const(w3), const(b3),
            ],
            out_specs=pl.BlockSpec((1, TB), lambda i: (0, i)),    # lane-dense out
        ),
        compiler_params=pltpu.CompilerParams(
            dimension_semantics=("parallel",),                    # 2 TCs on v7x
            vmem_limit_bytes=48 * 1024 * 1024,                    # headroom on v5e, fits v7x
        ),
    )(x, w1, b1, w2, b2, w3, b3)

    # (1, B) -> (B, 1): pure reshape, no extra transpose/copy kernel.
    return out_t.reshape(B, 1)


def init_params(key):
    """Deterministic init mirroring nn.Linear default (uniform +/- 1/sqrt(fan_in)).

    Weights keep PyTorch-native (out_features, in_features) layout; biases are
    stored as (out_features, 1) columns for lane-broadcast inside the kernel.
    """
    dims = [(32, 12), (32, 32), (1, 32)]
    params = []
    for (fan_out, fan_in) in dims:
        key, kw, kb = jax.random.split(key, 3)
        bound = 1.0 / (float(fan_in) ** 0.5)
        w = jax.random.uniform(kw, (fan_out, fan_in), jnp.float32, -bound, bound)
        b = jax.random.uniform(kb, (fan_out, 1), jnp.float32, -bound, bound)
        params.extend([w, b])
    return tuple(params)


def dqn_reference(x, params):
    """Pure-JAX reference (batch-major, like PyTorch)."""
    w1, b1, w2, b2, w3, b3 = params
    h = jnp.maximum(x @ w1.T + b1.T, 0.0)
    h = jnp.maximum(h @ w2.T + b2.T, 0.0)
    return h @ w3.T + b3.T


if __name__ == "__main__":
    key = jax.random.PRNGKey(0)
    key, kx1, kx2 = jax.random.split(key, 3)
    params = init_params(key)

    # Small batch: single (ragged) grid step, block larger than the array.
    B1 = 8
    x1 = jax.random.normal(kx1, (B1, 12), dtype=jnp.float32)
    out1 = jax.block_until_ready(dqn_forward(x1, params))
    ref1 = dqn_reference(x1, params)
    assert out1.shape == (B1, 1), out1.shape
    assert jnp.allclose(out1, ref1, atol=1e-5, rtol=1e-5), "mismatch (B=8)"

    # Ragged batch with a small tile: exercises multi-step grid (3 steps of
    # TB=128), edge-block masking (no jnp.pad), and VMEM-resident weights.
    B2 = 300
    x2 = jax.random.normal(kx2, (B2, 12), dtype=jnp.float32)
    out2 = jax.block_until_ready(dqn_forward(x2, params, tb=128))
    ref2 = dqn_reference(x2, params)
    assert out2.shape == (B2, 1), out2.shape
    assert jnp.allclose(out2, ref2, atol=1e-5, rtol=1e-5), "mismatch (B=300)"

    # Default tile path (TB clamp -> 2 grid steps) on a ragged mid-size batch.
    B3 = 300
    out3 = jax.block_until_ready(dqn_forward(x2, params))
    assert jnp.allclose(out3, ref2, atol=1e-5, rtol=1e-5), "mismatch (default tb)"

    print("KERNEL_OK")
</pallas_src>

<mosaic_0001>
module attributes {stable_mosaic.version = 11 : i64} {
  func.func @dqn_kernel(%arg0: i32, %arg1: memref<128x12xf32, #tpu.memory_space<vmem>>, %arg2: memref<32x12xf32, #tpu.memory_space<vmem>>, %arg3: memref<32x1xf32, #tpu.memory_space<vmem>>, %arg4: memref<32x32xf32, #tpu.memory_space<vmem>>, %arg5: memref<32x1xf32, #tpu.memory_space<vmem>>, %arg6: memref<1x32xf32, #tpu.memory_space<vmem>>, %arg7: memref<1x1xf32, #tpu.memory_space<vmem>>, %arg8: memref<1x128xf32, #tpu.memory_space<vmem>>) attributes {dimension_semantics = [#tpu.dimension_semantics<parallel>], iteration_bounds = array<i64: 1>, scalar_prefetch = 0 : i64, scratch_operands = 0 : i64, tpu.core_type = #tpu.core_type<tc>, window_params = [{transform_indices = @transform_0, window_bounds = array<i64: 128, 12>}, {pipeline_mode = #tpu.pipeline_mode<synchronous>, transform_indices = @transform_1, window_bounds = array<i64: 32, 12>}, {pipeline_mode = #tpu.pipeline_mode<synchronous>, transform_indices = @transform_2, window_bounds = array<i64: 32, 1>}, {pipeline_mode = #tpu.pipeline_mode<synchronous>, transform_indices = @transform_3, window_bounds = array<i64: 32, 32>}, {pipeline_mode = #tpu.pipeline_mode<synchronous>, transform_indices = @transform_4, window_bounds = array<i64: 32, 1>}, {pipeline_mode = #tpu.pipeline_mode<synchronous>, transform_indices = @transform_5, window_bounds = array<i64: 1, 32>}, {pipeline_mode = #tpu.pipeline_mode<synchronous>, transform_indices = @transform_6, window_bounds = array<i64: 1, 1>}, {transform_indices = @transform_7, window_bounds = array<i64: 1, 128>}]} {
    %c0 = arith.constant 0 : index
    %c0_0 = arith.constant 0 : index
    %0 = vector.load %arg1[%c0, %c0_0] : memref<128x12xf32, #tpu.memory_space<vmem>>, vector<128x12xf32>
    %c0_1 = arith.constant 0 : index
    %c0_2 = arith.constant 0 : index
    %1 = vector.load %arg2[%c0_1, %c0_2] : memref<32x12xf32, #tpu.memory_space<vmem>>, vector<32x12xf32>
    %cst = arith.constant dense<0.000000e+00> : vector<32x128xf32>
    %2 = tpu.matmul %1, %0, %cst {dimension_numbers = #tpu.dot_dimension_numbers<[1], [1], [0], [0], [0, 0, 1, 0], [], []>} : vector<32x12xf32>, vector<128x12xf32>, vector<32x128xf32> -> vector<32x128xf32>
    %c0_3 = arith.constant 0 : index
    %c0_4 = arith.constant 0 : index
    %3 = vector.load %arg3[%c0_3, %c0_4] : memref<32x1xf32, #tpu.memory_space<vmem>>, vector<32x1xf32>
    %4 = vector.broadcast %3 : vector<32x1xf32> to vector<32x128xf32>
    %5 = arith.addf %2, %4 : vector<32x128xf32>
    %cst_5 = arith.constant 0.000000e+00 : f32
    %6 = vector.broadcast %cst_5 : f32 to vector<32x128xf32>
    %7 = arith.maximumf %5, %6 : vector<32x128xf32>
    %c0_6 = arith.constant 0 : index
    %c0_7 = arith.constant 0 : index
    %8 = vector.load %arg4[%c0_6, %c0_7] : memref<32x32xf32, #tpu.memory_space<vmem>>, vector<32x32xf32>
    %cst_8 = arith.constant dense<0.000000e+00> : vector<32x128xf32>
    %9 = tpu.matmul %8, %7, %cst_8 {dimension_numbers = #tpu.dot_dimension_numbers<[1], [0], [0], [1], [0, 0, 1, 1], [], []>} : vector<32x32xf32>, vector<32x128xf32>, vector<32x128xf32> -> vector<32x128xf32>
    %c0_9 = arith.constant 0 : index
    %c0_10 = arith.constant 0 : index
    %10 = vector.load %arg5[%c0_9, %c0_10] : memref<32x1xf32, #tpu.memory_space<vmem>>, vector<32x1xf32>
    %11 = vector.broadcast %10 : vector<32x1xf32> to vector<32x128xf32>
    %12 = arith.addf %9, %11 : vector<32x128xf32>
    %cst_11 = arith.constant 0.000000e+00 : f32
    %13 = vector.broadcast %cst_11 : f32 to vector<32x128xf32>
    %14 = arith.maximumf %12, %13 : vector<32x128xf32>
    %c0_12 = arith.constant 0 : index
    %c0_13 = arith.constant 0 : index
    %15 = vector.load %arg6[%c0_12, %c0_13] : memref<1x32xf32, #tpu.memory_space<vmem>>, vector<1x32xf32>
    %cst_14 = arith.constant dense<0.000000e+00> : vector<1x128xf32>
    %16 = tpu.matmul %15, %14, %cst_14 {dimension_numbers = #tpu.dot_dimension_numbers<[1], [0], [0], [1], [0, 0, 1, 1], [], []>} : vector<1x32xf32>, vector<32x128xf32>, vector<1x128xf32> -> vector<1x128xf32>
    %c0_15 = arith.constant 0 : index
    %c0_16 = arith.constant 0 : index
    %17 = vector.load %arg7[%c0_15, %c0_16] : memref<1x1xf32, #tpu.memory_space<vmem>>, vector<1x1xf32>
    %18 = vector.broadcast %17 : vector<1x1xf32> to vector<1x128xf32>
    %19 = arith.addf %16, %18 : vector<1x128xf32>
    %c0_17 = arith.constant 0 : index
    %c0_18 = arith.constant 0 : index
    %20 = vector.load %arg8[%c0_17, %c0_18] : memref<1x128xf32, #tpu.memory_space<vmem>>, vector<1x128xf32>
    tpu.vector_store %arg8[%c0_17, %c0_18], %19 {strides = array<i32>} : memref<1x128xf32, #tpu.memory_space<vmem>>, vector<1x128xf32>,
    return
  }
  func.func @transform_0(%arg0: i32) -> (i32, i32) {
    %c0_i32 = arith.constant 0 : i32
    %c0_i32_0 = arith.constant 0 : i32
    return %arg0, %c0_i32 : i32, i32
  }
  func.func @transform_1(%arg0: i32) -> (i32, i32) {
    %c0_i32 = arith.constant 0 : i32
    %c0_i32_0 = arith.constant 0 : i32
    %c0_i32_1 = arith.constant 0 : i32
    return %c0_i32, %c0_i32_0 : i32, i32
  }
  func.func @transform_2(%arg0: i32) -> (i32, i32) {
    %c0_i32 = arith.constant 0 : i32
    %c0_i32_0 = arith.constant 0 : i32
    %c0_i32_1 = arith.constant 0 : i32
    return %c0_i32, %c0_i32_0 : i32, i32
  }
  func.func @transform_3(%arg0: i32) -> (i32, i32) {
    %c0_i32 = arith.constant 0 : i32
    %c0_i32_0 = arith.constant 0 : i32
    %c0_i32_1 = arith.constant 0 : i32
    return %c0_i32, %c0_i32_0 : i32, i32
  }
  func.func @transform_4(%arg0: i32) -> (i32, i32) {
    %c0_i32 = arith.constant 0 : i32
    %c0_i32_0 = arith.constant 0 : i32
    %c0_i32_1 = arith.constant 0 : i32
    return %c0_i32, %c0_i32_0 : i32, i32
  }
  func.func @transform_5(%arg0: i32) -> (i32, i32) {
    %c0_i32 = arith.constant 0 : i32
    %c0_i32_0 = arith.constant 0 : i32
    %c0_i32_1 = arith.constant 0 : i32
    return %c0_i32, %c0_i32_0 : i32, i32
  }
  func.func @transform_6(%arg0: i32) -> (i32, i32) {
    %c0_i32 = arith.constant 0 : i32
    %c0_i32_0 = arith.constant 0 : i32
    %c0_i32_1 = arith.constant 0 : i32
    return %c0_i32, %c0_i32_0 : i32, i32
  }
  func.func @transform_7(%arg0: i32) -> (i32, i32) {
    %c0_i32 = arith.constant 0 : i32
    %c0_i32_0 = arith.constant 0 : i32
    return %c0_i32, %arg0 : i32, i32
  }
}

</mosaic_0001>

<llo_original>
// kernel: tpu_custom_call.1
$region0: #{tpu_custom_call.1}
  #allocation0 [shape = 'u32[]', space=smem, size = 0x4, offset = 0x4, fixed_abs, tag = 'smem constant byte address 0x4 - core index']
  #allocation1 [shape = 'u32[72,128]{1,0:T(1,128)}', space=vmem, size = 0x9000, scoped, tag = 'internal scratch']
  #allocation2 [shape = 'f32[1,1]{1,0:T(1,128)S(1)}', space=vmem, size = 0x200, scoped, tag = 'scoped memory for tpu_custom_call.1']
  %s0 = inlined_call_operand.vmem [shape: f32[8,12], index: 0, kind: input, shape index: {}]
  %s1 = inlined_call_operand.vmem [shape: f32[32,12], index: 1, kind: input, shape index: {}]
  %s2 = inlined_call_operand.vmem [shape: f32[32,1], index: 2, kind: input, shape index: {}]
  %s3 = inlined_call_operand.vmem [shape: f32[32,32], index: 3, kind: input, shape index: {}]
  %s4 = inlined_call_operand.vmem [shape: f32[32,1], index: 4, kind: input, shape index: {}]
  %s5 = inlined_call_operand.vmem [shape: f32[1,32], index: 5, kind: input, shape index: {}]
  %s6 = inlined_call_operand.<no memory space> [shape: f32[1,1], index: 6, kind: input, shape index: {}]
  %s7 = inlined_call_operand.hbm [shape: f32[1,8], index: 7, kind: output, shape index: {}]
  %s8 = sld [smem:[#allocation0]]
  $region38: #{tpu_custom_call.1} parent=0
    _
  %s10 = ssub.s32 1, %s8
  %s11 = scalar_select 0, %s10, %s8
  %v12 = vstv %s6
  %13 = vst [vmem:[#allocation2] sm:$0x1] %v12
  $region1: #{tpu_custom_call.1} parent=0
    #allocation3 [shape = 'u8[512]{0}', space=vmem, size = 0x400, scoped, tag = 'output window, operand 0, single buffered']
    #allocation4 [shape = 's32[1]{0}', space=sflag, size = 0x4, scoped, tag = 'scoped memory for tpu_custom_call.1']
    %14 = vsyncpa [#allocation4], 0
    // Predicated region
    $region2: #{tpu_custom_call.1} parent=1 // pred_check
      _
    $region3: #{tpu_custom_call.1} parent=1 // pred_check_branch
      %16 = sbr.rel (0) target = $region5
    $region4: #{tpu_custom_call.1} parent=1 // pred_region
      _
    $region5: #{tpu_custom_call.1} parent=1 // pred_fallthru
      _
    // Predicated region
    $region6: #{tpu_custom_call.1} parent=1 // pred_check
      _
    $region7: #{tpu_custom_call.1} parent=1 // pred_check_branch
      %18 = sbr.rel (0) target = $region9
    $region8: #{tpu_custom_call.1} parent=1 // pred_region
      _
    $region9: #{tpu_custom_call.1} parent=1 // pred_fallthru
      _
    // Predicated region
    $region10: #{tpu_custom_call.1} parent=1 // pred_check
      _
    $region11: #{tpu_custom_call.1} parent=1 // pred_check_branch
      %20 = sbr.rel (0) target = $region13
    $region12: #{tpu_custom_call.1} parent=1 // pred_region
      _
    $region13: #{tpu_custom_call.1} parent=1 // pred_fallthru
      _
    // Predicated region
    $region14: #{tpu_custom_call.1} parent=1 // pred_check
      _
    $region15: #{tpu_custom_call.1} parent=1 // pred_check_branch
      %22 = sbr.rel (0) target = $region17
    $region16: #{tpu_custom_call.1} parent=1 // pred_region
      _
    $region17: #{tpu_custom_call.1} parent=1 // pred_fallthru
      _
    // Predicated region
    $region18: #{tpu_custom_call.1} parent=1 // pred_check
      _
    $region19: #{tpu_custom_call.1} parent=1 // pred_check_branch
      %24 = sbr.rel (0) target = $region21
    $region20: #{tpu_custom_call.1} parent=1 // pred_region
      _
    $region21: #{tpu_custom_call.1} parent=1 // pred_fallthru
      _
    // Predicated region
    $region22: #{tpu_custom_call.1} parent=1 // pred_check
      _
    $region23: #{tpu_custom_call.1} parent=1 // pred_check_branch
      %26 = sbr.rel (0) target = $region25
    $region24: #{tpu_custom_call.1} parent=1 // pred_region
      _
    $region25: #{tpu_custom_call.1} parent=1 // pred_fallthru
      _
    // Predicated region
    $region26: #{tpu_custom_call.1} parent=1 // pred_check
      _
    $region27: #{tpu_custom_call.1} parent=1 // pred_check_branch
      %28 = sbr.rel (0) target = $region29
    $region28: #{tpu_custom_call.1} parent=1 // pred_region
      _
    $region29: #{tpu_custom_call.1} parent=1 // pred_fallthru
      _
    %v29 = vld [vmem:[%s0] sm:$0xff]
    %v30 = vld [vmem:[%s0 + $0x8] sm:$0xff]
    %v31 = vld [vmem:[%s0 + $0x10] sm:$0xff]
    %v32 = vld [vmem:[%s0 + $0x18] sm:$0xff]
    %v33 = vld [vmem:[%s0 + $0x20] sm:$0xff]
    %v34 = vld [vmem:[%s0 + $0x28] sm:$0xff]
    %v35 = vld [vmem:[%s0 + $0x30] sm:$0xff]
    %v36 = vld [vmem:[%s0 + $0x38] sm:$0xff]
    %v37 = vld [vmem:[%s0 + $0x40] sm:$0xff]
    %v38 = vld [vmem:[%s0 + $0x48] sm:$0xff]
    %v39 = vld [vmem:[%s0 + $0x50] sm:$0xff]
    %v40 = vld [vmem:[%s0 + $0x58] sm:$0xff]
    %v41 = vld [vmem:[%s0 + $0x60] sm:$0xff]
    %v42 = vld [vmem:[%s0 + $0x68] sm:$0xff]
    %v43 = vld [vmem:[%s0 + $0x70] sm:$0xff]
    %v44 = vld [vmem:[%s0 + $0x78] sm:$0xff]
    %v45 = vld [vmem:[%s1] sm:$0xff]
    %v46 = vld [vmem:[%s1 + $0x8] sm:$0xff]
    %v47 = vld [vmem:[%s1 + $0x10] sm:$0xff]
    %v48 = vld [vmem:[%s1 + $0x18] sm:$0xff]
    %v49 = vld [vmem:[%s2] sm:$0xff]
    %v50 = vld [vmem:[%s2 + $0x8] sm:$0xff]
    %v51 = vld [vmem:[%s2 + $0x10] sm:$0xff]
    %v52 = vld [vmem:[%s2 + $0x18] sm:$0xff]
    %54 = vset.pattern.permute.xlu0 0
    %55 = vperm.xlu0 %54, %v49
    %v56 = vpop.permute.xlu0 %55
    %59 = vset.pattern.permute.xlu0 0
    %60 = vperm.xlu0 %59, %v50
    %v61 = vpop.permute.xlu0 %60
    %64 = vset.pattern.permute.xlu0 0
    %65 = vperm.xlu0 %64, %v51
    %v66 = vpop.permute.xlu0 %65
    %69 = vset.pattern.permute.xlu0 0
    %70 = vperm.xlu0 %69, %v52
    %v71 = vpop.permute.xlu0 %70
    %vm73 = vcmask 97280
    %v75 = vsel %vm73, %v45, 0
    %v78 = vsel %vm73, %v46, 0
    %v81 = vsel %vm73, %v47, 0
    %v84 = vsel %vm73, %v48, 0
    %v87 = vsel %vm73, %v29, 0
    %v90 = vsel %vm73, %v30, 0
    %v93 = vsel %vm73, %v31, 0
    %v96 = vsel %vm73, %v32, 0
    %v99 = vsel %vm73, %v33, 0
    %v102 = vsel %vm73, %v34, 0
    %v105 = vsel %vm73, %v35, 0
    %v108 = vsel %vm73, %v36, 0
    %v111 = vsel %vm73, %v37, 0
    %v114 = vsel %vm73, %v38, 0
    %v117 = vsel %vm73, %v39, 0
    %v120 = vsel %vm73, %v40, 0
    %v123 = vsel %vm73, %v41, 0
    %v126 = vsel %vm73, %v42, 0
    %v129 = vsel %vm73, %v43, 0
    %v132 = vsel %vm73, %v44, 0
    %134 = vmatpush.xpose.msra.mxu0 %v132
    %135 = vmatpush.xpose.msra.mxu0 %v129
    %136 = vmatpush.xpose.msra.mxu0 %v126
    %137 = vmatpush.xpose.msra.mxu0 %v123
    %138 = vmatpush.xpose.msra.mxu0 %v120
    %139 = vmatpush.xpose.msra.mxu0 %v117
    %140 = vmatpush.xpose.msra.mxu0 %v114
    %141 = vmatpush.xpose.msra.mxu0 %v111
    %142 = vmatpush.xpose.msra.mxu0 %v108
    %143 = vmatpush.xpose.msra.mxu0 %v105
    %144 = vmatpush.xpose.msra.mxu0 %v102
    %145 = vmatpush.xpose.msra.mxu0 %v99
    %146 = vmatpush.xpose.msra.mxu0 %v96
    %147 = vmatpush.xpose.msra.mxu0 %v93
    %148 = vmatpush.xpose.msra.mxu0 %v90
    %149 = vmatpush.xpose.msra.mxu0 %v87
    %150 = vmatmul.f32.gmra.mxu0 %v75
    %v151 = vpop.f32.mrf.mxu0
    %v152 = vadd.f32 %v56, %v151
    %153 = vmatmul.f32.gmra.mxu0 %v78
    %v154 = vpop.f32.mrf.mxu0
    %v155 = vadd.f32 %v61, %v154
    %156 = vmatmul.f32.gmra.mxu0 %v81
    %v157 = vpop.f32.mrf.mxu0
    %v158 = vadd.f32 %v66, %v157
    %159 = vmatmul.f32.gmra.mxu0 %v84
    %v160 = vpop.f32.mrf.mxu0
    %v161 = vadd.f32 %v71, %v160
    %162 = vdwg.mxu0
    %v163 = vmax.f32 %v152, 0.0
    %v164 = vmax.f32 %v155, 0.0
    %v165 = vmax.f32 %v158, 0.0
    %v166 = vmax.f32 %v161, 0.0
    %v167 = vld [vmem:[%s3] sm:$0xff]
    %v168 = vld [vmem:[%s3 + $0x8] sm:$0xff]
    %v169 = vld [vmem:[%s3 + $0x10] sm:$0xff]
    %v170 = vld [vmem:[%s3 + $0x18] sm:$0xff]
    %v171 = vld [vmem:[%s4] sm:$0xff]
    %v172 = vld [vmem:[%s4 + $0x8] sm:$0xff]
    %v173 = vld [vmem:[%s4 + $0x10] sm:$0xff]
    %v174 = vld [vmem:[%s4 + $0x18] sm:$0xff]
    %176 = vset.pattern.permute.xlu0 0
    %177 = vperm.xlu0 %176, %v171
    %v178 = vpop.permute.xlu0 %177
    %181 = vset.pattern.permute.xlu0 0
    %182 = vperm.xlu0 %181, %v172
    %v183 = vpop.permute.xlu0 %182
    %186 = vset.pattern.permute.xlu0 0
    %187 = vperm.xlu0 %186, %v173
    %v188 = vpop.permute.xlu0 %187
    %191 = vset.pattern.permute.xlu0 0
    %192 = vperm.xlu0 %191, %v174
    %v193 = vpop.permute.xlu0 %192
    %vm195 = vcmask 261120
    %v197 = vsel %vm195, %v167, 0
    %v200 = vsel %vm195, %v168, 0
    %v203 = vsel %vm195, %v169, 0
    %v206 = vsel %vm195, %v170, 0
    %208 = vmatpush.msra.mxu0 0.0
    %209 = vmatpush.msra.mxu0 0.0
    %210 = vmatpush.msra.mxu0 0.0
    %211 = vmatpush.msra.mxu0 0.0
    %212 = vmatpush.msra.mxu0 0.0
    %213 = vmatpush.msra.mxu0 0.0
    %214 = vmatpush.msra.mxu0 0.0
    %215 = vmatpush.msra.mxu0 0.0
    %216 = vmatpush.msra.mxu0 0.0
    %217 = vmatpush.msra.mxu0 0.0
    %218 = vmatpush.msra.mxu0 0.0
    %219 = vmatpush.msra.mxu0 0.0
    %220 = vmatpush.msra.mxu0 %v166
    %221 = vmatpush.msra.mxu0 %v165
    %222 = vmatpush.msra.mxu0 %v164
    %223 = vmatpush.msra.mxu0 %v163
    %224 = vmatmul.f32.gmra.mxu0 %v197
    %v225 = vpop.f32.mrf.mxu0
    %v226 = vadd.f32 %v178, %v225
    %227 = vmatmul.f32.gmra.mxu0 %v200
    %v228 = vpop.f32.mrf.mxu0
    %v229 = vadd.f32 %v183, %v228
    %230 = vmatmul.f32.gmra.mxu0 %v203
    %v231 = vpop.f32.mrf.mxu0
    %v232 = vadd.f32 %v188, %v231
    %233 = vmatmul.f32.gmra.mxu0 %v206
    %v234 = vpop.f32.mrf.mxu0
    %v235 = vadd.f32 %v193, %v234
    %236 = vdwg.mxu0
    %v237 = vmax.f32 %v226, 0.0
    %v238 = vmax.f32 %v229, 0.0
    %v239 = vmax.f32 %v232, 0.0
    %v240 = vmax.f32 %v235, 0.0
    %v241 = vld [vmem:[%s5] sm:$0x1]
    %v242 = vld [vmem:[#allocation2] sm:$0x1]
    %244 = vset.pattern.permute.xlu0 0
    %245 = vperm.xlu0 %244, %v242
    %v246 = vpop.permute.xlu0 %245
    %v248 = vperm.slane %v246, 0
    %v250 = vsel %vm195, %v241, 0
    %252 = vmatpush.msra.mxu0 0.0
    %253 = vmatpush.msra.mxu0 0.0
    %254 = vmatpush.msra.mxu0 0.0
    %255 = vmatpush.msra.mxu0 0.0
    %256 = vmatpush.msra.mxu0 0.0
    %257 = vmatpush.msra.mxu0 0.0
    %258 = vmatpush.msra.mxu0 0.0
    %259 = vmatpush.msra.mxu0 0.0
    %260 = vmatpush.msra.mxu0 0.0
    %261 = vmatpush.msra.mxu0 0.0
    %262 = vmatpush.msra.mxu0 0.0
    %263 = vmatpush.msra.mxu0 0.0
    %264 = vmatpush.msra.mxu0 %v240
    %265 = vmatpush.msra.mxu0 %v239
    %266 = vmatpush.msra.mxu0 %v238
    %267 = vmatpush.msra.mxu0 %v237
    %268 = vmatmul.f32.gmra.mxu0 %v250
    %v269 = vpop.f32.mrf.mxu0
    %v270 = vadd.f32 %v248, %v269
    %271 = vdwg.mxu0
    %272 = vst [vmem:[#allocation3] sm:$0x1] %v270
    // Predicated region
    $region30: #{tpu_custom_call.1} parent=1 // pred_check
      _
    $region31: #{tpu_custom_call.1} parent=1 // pred_check_branch
      %274 = sbr.rel (0) target = $region33
    $region32: #{tpu_custom_call.1} parent=1 // pred_region
      %276 = vsyncadd [#allocation4], 0
      %s278 = sshll.u32 [#allocation3], 4
      %s279 = int_to_ptr.vmem [resolvable:$true] %s278
      %s280 = sshll.u32 %s7, 4
      %s281 = int_to_ptr.hbm [resolvable:$true] %s280
      %283 = dma.vmem_to_hbm [thread:$0]  %s279, 16, %s281, [#allocation4]
    $region33: #{tpu_custom_call.1} parent=1 // pred_fallthru
      _
    // Predicated region
    $region34: #{tpu_custom_call.1} parent=1 // pred_check
      _
    $region35: #{tpu_custom_call.1} parent=1 // pred_check_branch
      %285 = sbr.rel (0) target = $region37
    $region36: #{tpu_custom_call.1} parent=1 // pred_region
      %287 = dma.done [#allocation4], 16
    $region37: #{tpu_custom_call.1} parent=1 // pred_fallthru
      _
    %288 = vsyncpa [#allocation4], 1

</llo_original>
